<compile_context>
chip_gen: v7x
topology: tpu7x:2x2x1
jax: 0.10.0
libtpu: 0.0.40
codegen_flags: <defaults>
</compile_context>

<pallas_src>
import functools

import jax
import jax.numpy as jnp
from jax.experimental import pallas as pl
from jax.experimental.pallas import tpu as pltpu


HIDDEN = 256
LANE = 128
SUBLANE = 8


def _cdiv(a, b):
    return -(-a // b)


def _round_up(x, m):
    return ((x + m - 1) // m) * m


def _idm_kernel(is_discrete, max_action, compute_dtype, n_split, rows_split,
                st_ref, ns_ref,
                w1a_ref, w1b_ref, w2_ref, w3_ref, w4_ref, w5_ref,
                b14_ref, b5_ref,
                out_ref):
    """Fused MLP: 4x (Linear+ReLU) -> Linear -> tanh*max_action or softmax.

    st_ref/ns_ref: (TB, state_dim) activation tiles (streamed over the grid).
    w*_ref/b*_ref: resident weights; b14_ref packs b1..b4 as rows of (4, 256).
    out_ref: (TB, out_pad) lane-dense output slab.
    """
    cd = compute_dtype
    # Resident weights (stay in VMEM across grid steps; index_map -> (0, 0)).
    w1a = w1a_ref[...]
    w1b = w1b_ref[...]
    w2 = w2_ref[...]
    w3 = w3_ref[...]
    w4 = w4_ref[...]
    w5 = w5_ref[...]
    b1 = b14_ref[0:1, :]
    b2 = b14_ref[1:2, :]
    b3 = b14_ref[2:3, :]
    b4 = b14_ref[3:4, :]
    b5 = b5_ref[...]
    zero = jnp.zeros((), cd)

    # Static Python loop over row sub-tiles: all chains land in one basic block
    # so the LLO scheduler can interleave MXU dots of one sub-tile with the VPU
    # epilogue of the other (v6e/v7x).  Sub-tile starts are sublane-aligned.
    for s in range(n_split):
        r0 = s * rows_split
        st = st_ref[pl.ds(r0, rows_split), :].astype(cd)
        ns = ns_ref[pl.ds(r0, rows_split), :].astype(cd)

        # Layer 1: split-weight matmul replaces the wrapper-side concatenation.
        # Keep the two dots as one fused sum (in-place MRB accumulation on v7x).
        z = (jnp.dot(st, w1a, preferred_element_type=jnp.float32)
             + jnp.dot(ns, w1b, preferred_element_type=jnp.float32)
             + b1)
        a = jnp.maximum(z.astype(cd), zero)   # ReLU after the cast

        z = jnp.dot(a, w2, preferred_element_type=jnp.float32) + b2
        a = jnp.maximum(z.astype(cd), zero)

        z = jnp.dot(a, w3, preferred_element_type=jnp.float32) + b3
        a = jnp.maximum(z.astype(cd), zero)

        z = jnp.dot(a, w4, preferred_element_type=jnp.float32) + b4
        a = jnp.maximum(z.astype(cd), zero)

        z = jnp.dot(a, w5, preferred_element_type=jnp.float32) + b5

        if is_discrete:
            # torch.nn.Softmax() on 2-D input defaults to dim=1 (last dim here).
            # Padded lanes carry a -1e30 bias, so exp(z_pad - m) == 0 exactly.
            # Exact divide so probabilities sum to 1 (the approx reciprocal was
            # the source of the previous sum-to-1 failure).
            m = jnp.max(z, axis=-1, keepdims=True)
            e = jnp.exp(z - m)
            out = e / jnp.sum(e, axis=-1, keepdims=True)
        else:
            out = max_action * jnp.tanh(z)

        out_ref[pl.ds(r0, rows_split), :] = out.astype(out_ref.dtype)


def init_idm_params(key, state_dim, action_dim, hidden=HIDDEN, dtype=jnp.float32):
    """PyTorch-nn.Linear-style init: uniform(-1/sqrt(fan_in), 1/sqrt(fan_in)).
    Weights stored as (in, out); biases as (1, out)."""
    dims = [(2 * state_dim, hidden), (hidden, hidden), (hidden, hidden),
            (hidden, hidden), (hidden, action_dim)]
    params = []
    keys = jax.random.split(key, 2 * len(dims))
    for i, (fan_in, fan_out) in enumerate(dims):
        bound = 1.0 / jnp.sqrt(jnp.asarray(fan_in, dtype))
        w = jax.random.uniform(keys[2 * i], (fan_in, fan_out), dtype,
                               minval=-bound, maxval=bound)
        b = jax.random.uniform(keys[2 * i + 1], (1, fan_out), dtype,
                               minval=-bound, maxval=bound)
        params.append((w, b))
    return params


def idm_forward(state, next_state, params, *, max_action, is_discrete,
                compute_dtype=jnp.bfloat16, block_b=1024,
                out_dtype=jnp.float32):
    """Pallas-backed IDM.forward.

    state, next_state: (B, state_dim) float32.
    compute_dtype: matmul input dtype (bf16 = fast MXU path on v5e/v6e/v7x;
                   accumulation is always f32 via preferred_element_type).
    block_b: max batch tile (multiple of 256 recommended on v6e/v7x).
    out_dtype: output dtype of the kernel (bf16 halves HBM writeback traffic).
    """
    B, state_dim = state.shape
    action_dim = params[-1][0].shape[1]
    cd = jnp.dtype(compute_dtype)
    od = jnp.dtype(out_dtype)

    # --- Batch tiling --------------------------------------------------------
    # Balanced tiles (cap padding waste to <2*SUBLANE rows per tile) and keep
    # the grid >= 2 steps for large batches so the "parallel" axis can shard
    # across v7x's two TensorCores (no-op on v5e/v6e).
    n_tiles = _cdiv(B, block_b)
    if n_tiles == 1 and B >= 512:
        n_tiles = 2
    tb = _round_up(max(1, _cdiv(B, n_tiles)), SUBLANE)
    if tb >= 32:
        # Enable 2-way in-kernel row sub-tiling; halves stay sublane-aligned.
        tb = _round_up(tb, 2 * SUBLANE)
        n_split = 2
    else:
        n_split = 1
    b_pad = n_tiles * tb
    grid = (n_tiles,)

    if b_pad != B:
        pad_rows = ((0, b_pad - B), (0, 0))
        state = jnp.pad(state, pad_rows)
        next_state = jnp.pad(next_state, pad_rows)

    # Lane-dense output slab (unmasked vst); wrapper slices the real columns.
    out_pad = _round_up(action_dim, LANE)

    (w1, b1), (w2, b2), (w3, b3), (w4, b4), (w5, b5) = params
    w1a = w1[:state_dim].astype(cd)
    w1b = w1[state_dim:].astype(cd)
    w2c = w2.astype(cd)
    w3c = w3.astype(cd)
    w4c = w4.astype(cd)
    w5p = jnp.pad(w5, ((0, 0), (0, out_pad - action_dim))).astype(cd)

    b14 = jnp.concatenate([b1, b2, b3, b4], axis=0).astype(jnp.float32)  # (4, 256)
    pad_bias = -1e30 if is_discrete else 0.0  # kill padded logits for softmax
    b5p = jnp.pad(b5.astype(jnp.float32), ((0, 0), (0, out_pad - action_dim)),
                  constant_values=pad_bias)

    def stream_spec(cols):
        return pl.BlockSpec((tb, cols), lambda i: (i, 0))

    def resident_spec(shape):
        return pl.BlockSpec(shape, lambda i: (0, 0))

    kernel = functools.partial(_idm_kernel, bool(is_discrete),
                               float(max_action), cd, n_split, tb // n_split)

    # Scoped-VMEM insurance: the footprint is only a few MB even at tb=2048,
    # but v5e's default scoped limit is 16 MiB, so raise it explicitly.
    weight_bytes = sum(int(a.size) * a.dtype.itemsize
                       for a in (w1a, w1b, w2c, w3c, w4c, w5p, b14, b5p))
    est = (2 * 2 * tb * state_dim * 4      # streamed inputs, double-buffered
           + 2 * tb * out_pad * od.itemsize  # output slab, double-buffered
           + 2 * weight_bytes)               # resident weights/biases
    vmem_limit = int(min(64 * 1024 * 1024, max(32 * 1024 * 1024, 2 * est)))

    out = pl.pallas_call(
        kernel,
        out_shape=jax.ShapeDtypeStruct((b_pad, out_pad), od),
        grid=grid,
        in_specs=[
            stream_spec(state_dim),           # state tile
            stream_spec(state_dim),           # next_state tile
            resident_spec(w1a.shape),
            resident_spec(w1b.shape),
            resident_spec(w2c.shape),
            resident_spec(w3c.shape),
            resident_spec(w4c.shape),
            resident_spec(w5p.shape),
            resident_spec(b14.shape),
            resident_spec(b5p.shape),
        ],
        out_specs=pl.BlockSpec((tb, out_pad), lambda i: (i, 0)),
        compiler_params=pltpu.CompilerParams(
            dimension_semantics=("parallel",),
            vmem_limit_bytes=vmem_limit),
    )(state, next_state, w1a, w1b, w2c, w3c, w4c, w5p, b14, b5p)

    return out[:B, :action_dim]


def idm_forward_ref(state, next_state, params, *, max_action, is_discrete):
    """Plain-JAX f32 reference for correctness checks."""
    a = jnp.concatenate([state, next_state], axis=1)
    for i, (w, b) in enumerate(params):
        a = a @ w + b
        if i < len(params) - 1:
            a = jnp.maximum(a, 0.0)
    if is_discrete:
        return jax.nn.softmax(a, axis=-1)
    return max_action * jnp.tanh(a)


if __name__ == "__main__":
    key = jax.random.PRNGKey(0)
    k_p, k_s, k_ns = jax.random.split(key, 3)

    batch = 8
    state_dim = 16
    action_dim = 8
    max_action = 2.0

    params = init_idm_params(k_p, state_dim, action_dim)
    state = jax.random.normal(k_s, (batch, state_dim), jnp.float32)
    next_state = jax.random.normal(k_ns, (batch, state_dim), jnp.float32)

    ref_cont = idm_forward_ref(state, next_state, params,
                               max_action=max_action, is_discrete=False)
    ref_disc = idm_forward_ref(state, next_state, params,
                               max_action=max_action, is_discrete=True)

    # --- f32 matmul path (tight tolerances) ---
    out_cont = jax.block_until_ready(
        idm_forward(state, next_state, params, max_action=max_action,
                    is_discrete=False, compute_dtype=jnp.float32))
    assert out_cont.shape == (batch, action_dim)
    assert jnp.allclose(out_cont, ref_cont, atol=1e-5, rtol=1e-5)

    out_disc = jax.block_until_ready(
        idm_forward(state, next_state, params, max_action=max_action,
                    is_discrete=True, compute_dtype=jnp.float32))
    assert jnp.allclose(out_disc, ref_disc, atol=1e-5, rtol=1e-5)
    assert jnp.allclose(jnp.sum(out_disc, axis=-1), 1.0, atol=1e-4)

    # --- bf16 matmul path (fast MXU path), f32 accumulation ---
    out_cont_bf = jax.block_until_ready(
        idm_forward(state, next_state, params, max_action=max_action,
                    is_discrete=False, compute_dtype=jnp.bfloat16))
    assert out_cont_bf.shape == (batch, action_dim)
    assert jnp.allclose(out_cont_bf, ref_cont, atol=5e-2, rtol=5e-2)

    out_disc_bf = jax.block_until_ready(
        idm_forward(state, next_state, params, max_action=max_action,
                    is_discrete=True, compute_dtype=jnp.bfloat16))
    assert jnp.allclose(out_disc_bf, ref_disc, atol=5e-2, rtol=5e-2)
    assert jnp.allclose(jnp.sum(out_disc_bf, axis=-1), 1.0, atol=1e-3)

    # --- multi-tile + 2-way sub-tile path (grid > 1, ragged batch) ---
    k_s2, k_ns2 = jax.random.split(jax.random.PRNGKey(1), 2)
    batch2 = 100
    state2 = jax.random.normal(k_s2, (batch2, state_dim), jnp.float32)
    next_state2 = jax.random.normal(k_ns2, (batch2, state_dim), jnp.float32)
    ref2 = idm_forward_ref(state2, next_state2, params,
                           max_action=max_action, is_discrete=True)
    out2 = jax.block_until_ready(
        idm_forward(state2, next_state2, params, max_action=max_action,
                    is_discrete=True, compute_dtype=jnp.float32, block_b=64))
    assert out2.shape == (batch2, action_dim)
    assert jnp.allclose(out2, ref2, atol=1e-5, rtol=1e-5)
    assert jnp.allclose(jnp.sum(out2, axis=-1), 1.0, atol=1e-4)

    print("KERNEL_OK")
</pallas_src>

<mosaic_0001>
module attributes {stable_mosaic.version = 11 : i64} {
  func.func @_idm_kernel(%arg0: i32, %arg1: memref<8x16xf32, #tpu.memory_space<vmem>>, %arg2: memref<8x16xf32, #tpu.memory_space<vmem>>, %arg3: memref<16x256xf32, #tpu.memory_space<vmem>>, %arg4: memref<16x256xf32, #tpu.memory_space<vmem>>, %arg5: memref<256x256xf32, #tpu.memory_space<vmem>>, %arg6: memref<256x256xf32, #tpu.memory_space<vmem>>, %arg7: memref<256x256xf32, #tpu.memory_space<vmem>>, %arg8: memref<256x128xf32, #tpu.memory_space<vmem>>, %arg9: memref<4x256xf32, #tpu.memory_space<vmem>>, %arg10: memref<1x128xf32, #tpu.memory_space<vmem>>, %arg11: memref<8x128xf32, #tpu.memory_space<vmem>>) attributes {dimension_semantics = [#tpu.dimension_semantics<parallel>], iteration_bounds = array<i64: 1>, scalar_prefetch = 0 : i64, scratch_operands = 0 : i64, tpu.core_type = #tpu.core_type<tc>, window_params = [{transform_indices = @transform_0, window_bounds = array<i64: 8, 16>}, {transform_indices = @transform_1, window_bounds = array<i64: 8, 16>}, {pipeline_mode = #tpu.pipeline_mode<synchronous>, transform_indices = @transform_2, window_bounds = array<i64: 16, 256>}, {pipeline_mode = #tpu.pipeline_mode<synchronous>, transform_indices = @transform_3, window_bounds = array<i64: 16, 256>}, {pipeline_mode = #tpu.pipeline_mode<synchronous>, transform_indices = @transform_4, window_bounds = array<i64: 256, 256>}, {pipeline_mode = #tpu.pipeline_mode<synchronous>, transform_indices = @transform_5, window_bounds = array<i64: 256, 256>}, {pipeline_mode = #tpu.pipeline_mode<synchronous>, transform_indices = @transform_6, window_bounds = array<i64: 256, 256>}, {pipeline_mode = #tpu.pipeline_mode<synchronous>, transform_indices = @transform_7, window_bounds = array<i64: 256, 128>}, {pipeline_mode = #tpu.pipeline_mode<synchronous>, transform_indices = @transform_8, window_bounds = array<i64: 4, 256>}, {pipeline_mode = #tpu.pipeline_mode<synchronous>, transform_indices = @transform_9, window_bounds = array<i64: 1, 128>}, {transform_indices = @transform_10, window_bounds = array<i64: 8, 128>}]} {
    %c0 = arith.constant 0 : index
    %c0_0 = arith.constant 0 : index
    %0 = vector.load %arg3[%c0, %c0_0] : memref<16x256xf32, #tpu.memory_space<vmem>>, vector<16x256xf32>
    %c0_1 = arith.constant 0 : index
    %c0_2 = arith.constant 0 : index
    %1 = vector.load %arg4[%c0_1, %c0_2] : memref<16x256xf32, #tpu.memory_space<vmem>>, vector<16x256xf32>
    %c0_3 = arith.constant 0 : index
    %c0_4 = arith.constant 0 : index
    %2 = vector.load %arg5[%c0_3, %c0_4] : memref<256x256xf32, #tpu.memory_space<vmem>>, vector<256x256xf32>
    %c0_5 = arith.constant 0 : index
    %c0_6 = arith.constant 0 : index
    %3 = vector.load %arg6[%c0_5, %c0_6] : memref<256x256xf32, #tpu.memory_space<vmem>>, vector<256x256xf32>
    %c0_7 = arith.constant 0 : index
    %c0_8 = arith.constant 0 : index
    %4 = vector.load %arg7[%c0_7, %c0_8] : memref<256x256xf32, #tpu.memory_space<vmem>>, vector<256x256xf32>
    %c0_9 = arith.constant 0 : index
    %c0_10 = arith.constant 0 : index
    %5 = vector.load %arg8[%c0_9, %c0_10] : memref<256x128xf32, #tpu.memory_space<vmem>>, vector<256x128xf32>
    %c0_11 = arith.constant 0 : index
    %c0_12 = arith.constant 0 : index
    %6 = vector.load %arg9[%c0_11, %c0_12] : memref<4x256xf32, #tpu.memory_space<vmem>>, vector<1x256xf32>
    %c1 = arith.constant 1 : index
    %c0_13 = arith.constant 0 : index
    %7 = vector.load %arg9[%c1, %c0_13] : memref<4x256xf32, #tpu.memory_space<vmem>>, vector<1x256xf32>
    %c2 = arith.constant 2 : index
    %c0_14 = arith.constant 0 : index
    %8 = vector.load %arg9[%c2, %c0_14] : memref<4x256xf32, #tpu.memory_space<vmem>>, vector<1x256xf32>
    %c3 = arith.constant 3 : index
    %c0_15 = arith.constant 0 : index
    %9 = vector.load %arg9[%c3, %c0_15] : memref<4x256xf32, #tpu.memory_space<vmem>>, vector<1x256xf32>
    %c0_16 = arith.constant 0 : index
    %c0_17 = arith.constant 0 : index
    %10 = vector.load %arg10[%c0_16, %c0_17] : memref<1x128xf32, #tpu.memory_space<vmem>>, vector<1x128xf32>
    %c0_18 = arith.constant 0 : index
    %c0_19 = arith.constant 0 : index
    %11 = vector.load %arg1[%c0_18, %c0_19] : memref<8x16xf32, #tpu.memory_space<vmem>>, vector<8x16xf32>
    %c0_20 = arith.constant 0 : index
    %c0_21 = arith.constant 0 : index
    %12 = vector.load %arg2[%c0_20, %c0_21] : memref<8x16xf32, #tpu.memory_space<vmem>>, vector<8x16xf32>
    %cst = arith.constant dense<0.000000e+00> : vector<8x256xf32>
    %13 = tpu.matmul %11, %0, %cst {dimension_numbers = #tpu.dot_dimension_numbers<[1], [0], [0], [1], [0, 0, 1, 1], [], []>} : vector<8x16xf32>, vector<16x256xf32>, vector<8x256xf32> -> vector<8x256xf32>
    %cst_22 = arith.constant dense<0.000000e+00> : vector<8x256xf32>
    %14 = tpu.matmul %12, %1, %cst_22 {dimension_numbers = #tpu.dot_dimension_numbers<[1], [0], [0], [1], [0, 0, 1, 1], [], []>} : vector<8x16xf32>, vector<16x256xf32>, vector<8x256xf32> -> vector<8x256xf32>
    %15 = arith.addf %13, %14 : vector<8x256xf32>
    %16 = vector.broadcast %6 : vector<1x256xf32> to vector<8x256xf32>
    %17 = arith.addf %15, %16 : vector<8x256xf32>
    %cst_23 = arith.constant 0.000000e+00 : f32
    %18 = vector.broadcast %cst_23 : f32 to vector<8x256xf32>
    %19 = arith.maximumf %17, %18 : vector<8x256xf32>
    %cst_24 = arith.constant dense<0.000000e+00> : vector<8x256xf32>
    %20 = tpu.matmul %19, %2, %cst_24 {dimension_numbers = #tpu.dot_dimension_numbers<[1], [0], [0], [1], [0, 0, 1, 1], [], []>} : vector<8x256xf32>, vector<256x256xf32>, vector<8x256xf32> -> vector<8x256xf32>
    %21 = vector.broadcast %7 : vector<1x256xf32> to vector<8x256xf32>
    %22 = arith.addf %20, %21 : vector<8x256xf32>
    %cst_25 = arith.constant 0.000000e+00 : f32
    %23 = vector.broadcast %cst_25 : f32 to vector<8x256xf32>
    %24 = arith.maximumf %22, %23 : vector<8x256xf32>
    %cst_26 = arith.constant dense<0.000000e+00> : vector<8x256xf32>
    %25 = tpu.matmul %24, %3, %cst_26 {dimension_numbers = #tpu.dot_dimension_numbers<[1], [0], [0], [1], [0, 0, 1, 1], [], []>} : vector<8x256xf32>, vector<256x256xf32>, vector<8x256xf32> -> vector<8x256xf32>
    %26 = vector.broadcast %8 : vector<1x256xf32> to vector<8x256xf32>
    %27 = arith.addf %25, %26 : vector<8x256xf32>
    %cst_27 = arith.constant 0.000000e+00 : f32
    %28 = vector.broadcast %cst_27 : f32 to vector<8x256xf32>
    %29 = arith.maximumf %27, %28 : vector<8x256xf32>
    %cst_28 = arith.constant dense<0.000000e+00> : vector<8x256xf32>
    %30 = tpu.matmul %29, %4, %cst_28 {dimension_numbers = #tpu.dot_dimension_numbers<[1], [0], [0], [1], [0, 0, 1, 1], [], []>} : vector<8x256xf32>, vector<256x256xf32>, vector<8x256xf32> -> vector<8x256xf32>
    %31 = vector.broadcast %9 : vector<1x256xf32> to vector<8x256xf32>
    %32 = arith.addf %30, %31 : vector<8x256xf32>
    %cst_29 = arith.constant 0.000000e+00 : f32
    %33 = vector.broadcast %cst_29 : f32 to vector<8x256xf32>
    %34 = arith.maximumf %32, %33 : vector<8x256xf32>
    %cst_30 = arith.constant dense<0.000000e+00> : vector<8x128xf32>
    %35 = tpu.matmul %34, %5, %cst_30 {dimension_numbers = #tpu.dot_dimension_numbers<[1], [0], [0], [1], [0, 0, 1, 1], [], []>} : vector<8x256xf32>, vector<256x128xf32>, vector<8x128xf32> -> vector<8x128xf32>
    %36 = vector.broadcast %10 : vector<1x128xf32> to vector<8x128xf32>
    %37 = arith.addf %35, %36 : vector<8x128xf32>
    %38 = math.tanh %37 : vector<8x128xf32>
    %cst_31 = arith.constant 2.000000e+00 : f32
    %39 = vector.broadcast %cst_31 : f32 to vector<8x128xf32>
    %40 = arith.mulf %39, %38 : vector<8x128xf32>
    %c0_32 = arith.constant 0 : index
    %c0_33 = arith.constant 0 : index
    %41 = vector.load %arg11[%c0_32, %c0_33] : memref<8x128xf32, #tpu.memory_space<vmem>>, vector<8x128xf32>
    tpu.vector_store %arg11[%c0_32, %c0_33], %40 {strides = array<i32>} : memref<8x128xf32, #tpu.memory_space<vmem>>, vector<8x128xf32>,
    return
  }
  func.func @transform_0(%arg0: i32) -> (i32, i32) {
    %c0_i32 = arith.constant 0 : i32
    %c0_i32_0 = arith.constant 0 : i32
    return %arg0, %c0_i32 : i32, i32
  }
  func.func @transform_1(%arg0: i32) -> (i32, i32) {
    %c0_i32 = arith.constant 0 : i32
    %c0_i32_0 = arith.constant 0 : i32
    return %arg0, %c0_i32 : i32, i32
  }
  func.func @transform_2(%arg0: i32) -> (i32, i32) {
    %c0_i32 = arith.constant 0 : i32
    %c0_i32_0 = arith.constant 0 : i32
    %c0_i32_1 = arith.constant 0 : i32
    return %c0_i32, %c0_i32_0 : i32, i32
  }
  func.func @transform_3(%arg0: i32) -> (i32, i32) {
    %c0_i32 = arith.constant 0 : i32
    %c0_i32_0 = arith.constant 0 : i32
    %c0_i32_1 = arith.constant 0 : i32
    return %c0_i32, %c0_i32_0 : i32, i32
  }
  func.func @transform_4(%arg0: i32) -> (i32, i32) {
    %c0_i32 = arith.constant 0 : i32
    %c0_i32_0 = arith.constant 0 : i32
    %c0_i32_1 = arith.constant 0 : i32
    return %c0_i32, %c0_i32_0 : i32, i32
  }
  func.func @transform_5(%arg0: i32) -> (i32, i32) {
    %c0_i32 = arith.constant 0 : i32
    %c0_i32_0 = arith.constant 0 : i32
    %c0_i32_1 = arith.constant 0 : i32
    return %c0_i32, %c0_i32_0 : i32, i32
  }
  func.func @transform_6(%arg0: i32) -> (i32, i32) {
    %c0_i32 = arith.constant 0 : i32
    %c0_i32_0 = arith.constant 0 : i32
    %c0_i32_1 = arith.constant 0 : i32
    return %c0_i32, %c0_i32_0 : i32, i32
  }
  func.func @transform_7(%arg0: i32) -> (i32, i32) {
    %c0_i32 = arith.constant 0 : i32
    %c0_i32_0 = arith.constant 0 : i32
    %c0_i32_1 = arith.constant 0 : i32
    return %c0_i32, %c0_i32_0 : i32, i32
  }
  func.func @transform_8(%arg0: i32) -> (i32, i32) {
    %c0_i32 = arith.constant 0 : i32
    %c0_i32_0 = arith.constant 0 : i32
    %c0_i32_1 = arith.constant 0 : i32
    return %c0_i32, %c0_i32_0 : i32, i32
  }
  func.func @transform_9(%arg0: i32) -> (i32, i32) {
    %c0_i32 = arith.constant 0 : i32
    %c0_i32_0 = arith.constant 0 : i32
    %c0_i32_1 = arith.constant 0 : i32
    return %c0_i32, %c0_i32_0 : i32, i32
  }
  func.func @transform_10(%arg0: i32) -> (i32, i32) {
    %c0_i32 = arith.constant 0 : i32
    %c0_i32_0 = arith.constant 0 : i32
    return %arg0, %c0_i32 : i32, i32
  }
}

</mosaic_0001>

<llo_original>
// kernel: tpu_custom_call.1
$region0: #{tpu_custom_call.1}
  #allocation0 [shape = 'u32[]', space=smem, size = 0x4, offset = 0x4, fixed_abs, tag = 'smem constant byte address 0x4 - core index']
  #allocation1 [shape = 'u32[144,128]{1,0:T(1,128)}', space=vmem, size = 0x12000, scoped, tag = 'internal scratch']
  %s0 = inlined_call_operand.hbm [shape: f32[8,16], index: 0, kind: input, shape index: {}]
  %s1 = inlined_call_operand.hbm [shape: f32[8,16], index: 1, kind: input, shape index: {}]
  %s2 = inlined_call_operand.hbm [shape: f32[16,256], index: 2, kind: input, shape index: {}]
  %s3 = inlined_call_operand.hbm [shape: f32[16,256], index: 3, kind: input, shape index: {}]
  %s4 = inlined_call_operand.hbm [shape: f32[256,256], index: 4, kind: input, shape index: {}]
  %s5 = inlined_call_operand.hbm [shape: f32[256,256], index: 5, kind: input, shape index: {}]
  %s6 = inlined_call_operand.hbm [shape: f32[256,256], index: 6, kind: input, shape index: {}]
  %s7 = inlined_call_operand.hbm [shape: f32[256,128], index: 7, kind: input, shape index: {}]
  %s8 = inlined_call_operand.vmem [shape: f32[4,256], index: 8, kind: input, shape index: {}]
  %s9 = inlined_call_operand.vmem [shape: f32[1,128], index: 9, kind: input, shape index: {}]
  %s10 = inlined_call_operand.hbm [shape: f32[8,128], index: 10, kind: output, shape index: {}]
  %s11 = sld [smem:[#allocation0]]
  $region82: #{tpu_custom_call.1} parent=0
    _
  %s13 = ssub.s32 1, %s11
  %s14 = scalar_select 0, %s13, %s11
  $region1: #{tpu_custom_call.1} parent=0
    #allocation2 [shape = 'u8[4096]{0}', space=vmem, size = 0x1000, scoped, tag = 'input window, operand 0, single buffered']
    #allocation3 [shape = 's32[1]{0}', space=sflag, size = 0x4, scoped, tag = 'scoped memory for tpu_custom_call.1']
    #allocation4 [shape = 's32[1]{0}', space=sflag, size = 0x4, scoped, tag = 'scoped memory for tpu_custom_call.1']
    #allocation5 [shape = 'u8[4096]{0}', space=vmem, size = 0x1000, scoped, tag = 'input window, operand 1, single buffered']
    #allocation6 [shape = 's32[1]{0}', space=sflag, size = 0x4, scoped, tag = 'scoped memory for tpu_custom_call.1']
    #allocation7 [shape = 'u8[16384]{0}', space=vmem, size = 0x4000, scoped, tag = 'input window, operand 2, single buffered']
    #allocation8 [shape = 'u8[16384]{0}', space=vmem, size = 0x4000, scoped, tag = 'input window, operand 3, single buffered']
    #allocation9 [shape = 's32[1]{0}', space=sflag, size = 0x4, scoped, tag = 'scoped memory for tpu_custom_call.1']
    #allocation10 [shape = 'u8[262144]{0}', space=vmem, size = 0x40000, scoped, tag = 'input window, operand 4, single buffered']
    #allocation11 [shape = 'u8[262144]{0}', space=vmem, size = 0x40000, scoped, tag = 'input window, operand 5, single buffered']
    #allocation12 [shape = 's32[1]{0}', space=sflag, size = 0x4, scoped, tag = 'scoped memory for tpu_custom_call.1']
    #allocation13 [shape = 'u8[262144]{0}', space=vmem, size = 0x40000, scoped, tag = 'input window, operand 6, single buffered']
    #allocation14 [shape = 'u8[131072]{0}', space=vmem, size = 0x20000, scoped, tag = 'input window, operand 7, single buffered']
    #allocation15 [shape = 's32[1]{0}', space=sflag, size = 0x4, scoped, tag = 'scoped memory for tpu_custom_call.1']
    #allocation16 [shape = 'u8[4096]{0}', space=vmem, size = 0x1000, scoped, tag = 'output window, operand 0, single buffered']
    %15 = vsyncpa [#allocation3], 0
    %16 = vsyncpa [#allocation6], 0
    %17 = vsyncpa [#allocation9], 0
    %18 = vsyncpa [#allocation12], 0
    %19 = vsyncpa [#allocation15], 0
    %20 = vsyncpa [#allocation4], 0
    // Predicated region
    $region2: #{tpu_custom_call.1} parent=1 // pred_check
      _
    $region3: #{tpu_custom_call.1} parent=1 // pred_check_branch
      %22 = sbr.rel (0) target = $region5
    $region4: #{tpu_custom_call.1} parent=1 // pred_region
      %s24 = ssub.s32 128, 128
      %25 = vsyncadd [#allocation3], %s24
      %s27 = sshll.u32 [#allocation2], 4
      %s28 = int_to_ptr.vmem [resolvable:$true] %s27
      %30 = dma.hbm_to_vmem [thread:$0]  %s0, 128, %s28, [#allocation3]
    $region5: #{tpu_custom_call.1} parent=1 // pred_fallthru
      _
    // Predicated region
    $region6: #{tpu_custom_call.1} parent=1 // pred_check
      _
    $region7: #{tpu_custom_call.1} parent=1 // pred_check_branch
      %32 = sbr.rel (0) target = $region9
    $region8: #{tpu_custom_call.1} parent=1 // pred_region
      %s34 = ssub.s32 128, 128
      %35 = vsyncadd [#allocation6], %s34
      %s37 = sshll.u32 [#allocation5], 4
      %s38 = int_to_ptr.vmem [resolvable:$true] %s37
      %40 = dma.hbm_to_vmem [thread:$0]  %s1, 128, %s38, [#allocation6]
    $region9: #{tpu_custom_call.1} parent=1 // pred_fallthru
      _
    // Predicated region
    $region10: #{tpu_custom_call.1} parent=1 // pred_check
      _
    $region11: #{tpu_custom_call.1} parent=1 // pred_check_branch
      %42 = sbr.rel (0) target = $region13
    $region12: #{tpu_custom_call.1} parent=1 // pred_region
      %s44 = ssub.s32 512, 512
      %45 = vsyncadd [#allocation6], %s44
      %s46 = sshll.u32 [#allocation7], 4
      %s47 = int_to_ptr.vmem [resolvable:$true] %s46
      %52 = dma.hbm_to_vmem [thread:$0]  %s2, 512, %s47, [#allocation6], 256, 256, 16
    $region13: #{tpu_custom_call.1} parent=1 // pred_fallthru
      _
    // Predicated region
    $region14: #{tpu_custom_call.1} parent=1 // pred_check
      _
    $region15: #{tpu_custom_call.1} parent=1 // pred_check_branch
      %54 = sbr.rel (0) target = $region17
    $region16: #{tpu_custom_call.1} parent=1 // pred_region
      %s56 = ssub.s32 512, 512
      %57 = vsyncadd [#allocation9], %s56
      %s58 = sshll.u32 [#allocation8], 4
      %s59 = int_to_ptr.vmem [resolvable:$true] %s58
      %64 = dma.hbm_to_vmem [thread:$0]  %s3, 512, %s59, [#allocation9], 256, 256, 16
    $region17: #{tpu_custom_call.1} parent=1 // pred_fallthru
      _
    // Predicated region
    $region18: #{tpu_custom_call.1} parent=1 // pred_check
      _
    $region19: #{tpu_custom_call.1} parent=1 // pred_check_branch
      %66 = sbr.rel (0) target = $region21
    $region20: #{tpu_custom_call.1} parent=1 // pred_region
      %s68 = ssub.s32 8192, 8192
      %69 = vsyncadd [#allocation9], %s68
      %s70 = sshll.u32 [#allocation10], 4
      %s71 = int_to_ptr.vmem [resolvable:$true] %s70
      %76 = dma.hbm_to_vmem [thread:$0]  %s4, 8192, %s71, [#allocation9], 256, 256, 16
    $region21: #{tpu_custom_call.1} parent=1 // pred_fallthru
      _
    // Predicated region
    $region22: #{tpu_custom_call.1} parent=1 // pred_check
      _
    $region23: #{tpu_custom_call.1} parent=1 // pred_check_branch
      %78 = sbr.rel (0) target = $region25
    $region24: #{tpu_custom_call.1} parent=1 // pred_region
      %s80 = ssub.s32 8192, 8192
      %81 = vsyncadd [#allocation12], %s80
      %s82 = sshll.u32 [#allocation11], 4
      %s83 = int_to_ptr.vmem [resolvable:$true] %s82
      %88 = dma.hbm_to_vmem [thread:$0]  %s5, 8192, %s83, [#allocation12], 256, 256, 16
    $region25: #{tpu_custom_call.1} parent=1 // pred_fallthru
      _
    // Predicated region
    $region26: #{tpu_custom_call.1} parent=1 // pred_check
      _
    $region27: #{tpu_custom_call.1} parent=1 // pred_check_branch
      %90 = sbr.rel (0) target = $region29
    $region28: #{tpu_custom_call.1} parent=1 // pred_region
      %s92 = ssub.s32 8192, 8192
      %93 = vsyncadd [#allocation12], %s92
      %s94 = sshll.u32 [#allocation13], 4
      %s95 = int_to_ptr.vmem [resolvable:$true] %s94
      %100 = dma.hbm_to_vmem [thread:$0]  %s6, 8192, %s95, [#allocation12], 256, 256, 16
    $region29: #{tpu_custom_call.1} parent=1 // pred_fallthru
      _
    // Predicated region
    $region30: #{tpu_custom_call.1} parent=1 // pred_check
      _
    $region31: #{tpu_custom_call.1} parent=1 // pred_check_branch
      %102 = sbr.rel (0) target = $region33
    $region32: #{tpu_custom_call.1} parent=1 // pred_region
      %s104 = ssub.s32 4096, 4096
      %105 = vsyncadd [#allocation15], %s104
      %s106 = sshll.u32 [#allocation14], 4
      %s107 = int_to_ptr.vmem [resolvable:$true] %s106
      %112 = dma.hbm_to_vmem [thread:$0]  %s7, 4096, %s107, [#allocation15], 128, 128, 8
    $region33: #{tpu_custom_call.1} parent=1 // pred_fallthru
      _
    // Predicated region
    $region34: #{tpu_custom_call.1} parent=1 // pred_check
      _
    $region35: #{tpu_custom_call.1} parent=1 // pred_check_branch
      %114 = sbr.rel (0) target = $region37
    $region36: #{tpu_custom_call.1} parent=1 // pred_region
      _
    $region37: #{tpu_custom_call.1} parent=1 // pred_fallthru
      _
    // Predicated region
    $region38: #{tpu_custom_call.1} parent=1 // pred_check
      _
    $region39: #{tpu_custom_call.1} parent=1 // pred_check_branch
      %116 = sbr.rel (0) target = $region41
    $region40: #{tpu_custom_call.1} parent=1 // pred_region
      _
    $region41: #{tpu_custom_call.1} parent=1 // pred_fallthru
      _
    // Predicated region
    $region42: #{tpu_custom_call.1} parent=1 // pred_check
      _
    $region43: #{tpu_custom_call.1} parent=1 // pred_check_branch
      %118 = sbr.rel (0) target = $region45
    $region44: #{tpu_custom_call.1} parent=1 // pred_region
      %119 = dma.done [#allocation3], 128
    $region45: #{tpu_custom_call.1} parent=1 // pred_fallthru
      _
    // Predicated region
    $region46: #{tpu_custom_call.1} parent=1 // pred_check
      _
    $region47: #{tpu_custom_call.1} parent=1 // pred_check_branch
      %121 = sbr.rel (0) target = $region49
    $region48: #{tpu_custom_call.1} parent=1 // pred_region
      %122 = dma.done [#allocation6], 128
    $region49: #{tpu_custom_call.1} parent=1 // pred_fallthru
      _
    // Predicated region
    $region50: #{tpu_custom_call.1} parent=1 // pred_check
      _
    $region51: #{tpu_custom_call.1} parent=1 // pred_check_branch
      %124 = sbr.rel (0) target = $region53
    $region52: #{tpu_custom_call.1} parent=1 // pred_region
      %125 = dma.done [#allocation6], 512
    $region53: #{tpu_custom_call.1} parent=1 // pred_fallthru
      _
    // Predicated region
    $region54: #{tpu_custom_call.1} parent=1 // pred_check
      _
    $region55: #{tpu_custom_call.1} parent=1 // pred_check_branch
      %127 = sbr.rel (0) target = $region57
    $region56: #{tpu_custom_call.1} parent=1 // pred_region
      %128 = dma.done [#allocation9], 512
    $region57: #{tpu_custom_call.1} parent=1 // pred_fallthru
      _
    // Predicated region
    $region58: #{tpu_custom_call.1} parent=1 // pred_check
      _
    $region59: #{tpu_custom_call.1} parent=1 // pred_check_branch
      %130 = sbr.rel (0) target = $region61
    $region60: #{tpu_custom_call.1} parent=1 // pred_region
      %131 = dma.done [#allocation9], 8192
    $region61: #{tpu_custom_call.1} parent=1 // pred_fallthru
      _
    // Predicated region
    $region62: #{tpu_custom_call.1} parent=1 // pred_check
      _
    $region63: #{tpu_custom_call.1} parent=1 // pred_check_branch
      %133 = sbr.rel (0) target = $region65
    $region64: #{tpu_custom_call.1} parent=1 // pred_region
      %134 = dma.done [#allocation12], 8192
    $region65: #{tpu_custom_call.1} parent=1 // pred_fallthru
      _
    // Predicated region
    $region66: #{tpu_custom_call.1} parent=1 // pred_check
      _
    $region67: #{tpu_custom_call.1} parent=1 // pred_check_branch
      %136 = sbr.rel (0) target = $region69
    $region68: #{tpu_custom_call.1} parent=1 // pred_region
      %137 = dma.done [#allocation12], 8192
    $region69: #{tpu_custom_call.1} parent=1 // pred_fallthru
      _
    // Predicated region
    $region70: #{tpu_custom_call.1} parent=1 // pred_check
      _
    $region71: #{tpu_custom_call.1} parent=1 // pred_check_branch
      %139 = sbr.rel (0) target = $region73
    $region72: #{tpu_custom_call.1} parent=1 // pred_region
      %140 = dma.done [#allocation15], 4096
    $region73: #{tpu_custom_call.1} parent=1 // pred_fallthru
      _
    %v141 = vld [vmem:[#allocation7] sm:$0xff]
    %v142 = vld [vmem:[#allocation7 + $0x8] sm:$0xff]
    %v143 = vld [vmem:[#allocation7 + $0x10] sm:$0xff]
    %v144 = vld [vmem:[#allocation7 + $0x18] sm:$0xff]
    %v145 = vld [vmem:[#allocation8] sm:$0xff]
    %v146 = vld [vmem:[#allocation8 + $0x8] sm:$0xff]
    %v147 = vld [vmem:[#allocation8 + $0x10] sm:$0xff]
    %v148 = vld [vmem:[#allocation8 + $0x18] sm:$0xff]
    %v149 = vld [vmem:[#allocation10] sm:$0xff]
    %v150 = vld [vmem:[#allocation10 + $0x8] sm:$0xff]
    %v151 = vld [vmem:[#allocation10 + $0x10] sm:$0xff]
    %v152 = vld [vmem:[#allocation10 + $0x18] sm:$0xff]
    %v153 = vld [vmem:[#allocation10 + $0x20] sm:$0xff]
    %v154 = vld [vmem:[#allocation10 + $0x28] sm:$0xff]
    %v155 = vld [vmem:[#allocation10 + $0x30] sm:$0xff]
    %v156 = vld [vmem:[#allocation10 + $0x38] sm:$0xff]
    %v157 = vld [vmem:[#allocation10 + $0x40] sm:$0xff]
    %v158 = vld [vmem:[#allocation10 + $0x48] sm:$0xff]
    %v159 = vld [vmem:[#allocation10 + $0x50] sm:$0xff]
    %v160 = vld [vmem:[#allocation10 + $0x58] sm:$0xff]
    %v161 = vld [vmem:[#allocation10 + $0x60] sm:$0xff]
    %v162 = vld [vmem:[#allocation10 + $0x68] sm:$0xff]
    %v163 = vld [vmem:[#allocation10 + $0x70] sm:$0xff]
    %v164 = vld [vmem:[#allocation10 + $0x78] sm:$0xff]
    %v165 = vld [vmem:[#allocation10 + $0x80] sm:$0xff]
    %v166 = vld [vmem:[#allocation10 + $0x88] sm:$0xff]
    %v167 = vld [vmem:[#allocation10 + $0x90] sm:$0xff]
    %v168 = vld [vmem:[#allocation10 + $0x98] sm:$0xff]
    %v169 = vld [vmem:[#allocation10 + $0xa0] sm:$0xff]
    %v170 = vld [vmem:[#allocation10 + $0xa8] sm:$0xff]
    %v171 = vld [vmem:[#allocation10 + $0xb0] sm:$0xff]
    %v172 = vld [vmem:[#allocation10 + $0xb8] sm:$0xff]
    %v173 = vld [vmem:[#allocation10 + $0xc0] sm:$0xff]
    %v174 = vld [vmem:[#allocation10 + $0xc8] sm:$0xff]
    %v175 = vld [vmem:[#allocation10 + $0xd0] sm:$0xff]
    %v176 = vld [vmem:[#allocation10 + $0xd8] sm:$0xff]
    %v177 = vld [vmem:[#allocation10 + $0xe0] sm:$0xff]
    %v178 = vld [vmem:[#allocation10 + $0xe8] sm:$0xff]
    %v179 = vld [vmem:[#allocation10 + $0xf0] sm:$0xff]
    %v180 = vld [vmem:[#allocation10 + $0xf8] sm:$0xff]
    %v181 = vld [vmem:[#allocation10 + $0x100] sm:$0xff]
    %v182 = vld [vmem:[#allocation10 + $0x108] sm:$0xff]
    %v183 = vld [vmem:[#allocation10 + $0x110] sm:$0xff]
    %v184 = vld [vmem:[#allocation10 + $0x118] sm:$0xff]
    %v185 = vld [vmem:[#allocation10 + $0x120] sm:$0xff]
    %v186 = vld [vmem:[#allocation10 + $0x128] sm:$0xff]
    %v187 = vld [vmem:[#allocation10 + $0x130] sm:$0xff]
    %v188 = vld [vmem:[#allocation10 + $0x138] sm:$0xff]
    %v189 = vld [vmem:[#allocation10 + $0x140] sm:$0xff]
    %v190 = vld [vmem:[#allocation10 + $0x148] sm:$0xff]
    %v191 = vld [vmem:[#allocation10 + $0x150] sm:$0xff]
    %v192 = vld [vmem:[#allocation10 + $0x158] sm:$0xff]
    %v193 = vld [vmem:[#allocation10 + $0x160] sm:$0xff]
    %v194 = vld [vmem:[#allocation10 + $0x168] sm:$0xff]
    %v195 = vld [vmem:[#allocation10 + $0x170] sm:$0xff]
    %v196 = vld [vmem:[#allocation10 + $0x178] sm:$0xff]
    %v197 = vld [vmem:[#allocation10 + $0x180] sm:$0xff]
    %v198 = vld [vmem:[#allocation10 + $0x188] sm:$0xff]
    %v199 = vld [vmem:[#allocation10 + $0x190] sm:$0xff]
    %v200 = vld [vmem:[#allocation10 + $0x198] sm:$0xff]
    %v201 = vld [vmem:[#allocation10 + $0x1a0] sm:$0xff]
    %v202 = vld [vmem:[#allocation10 + $0x1a8] sm:$0xff]
    %v203 = vld [vmem:[#allocation10 + $0x1b0] sm:$0xff]
    %v204 = vld [vmem:[#allocation10 + $0x1b8] sm:$0xff]
    %v205 = vld [vmem:[#allocation10 + $0x1c0] sm:$0xff]
    %v206 = vld [vmem:[#allocation10 + $0x1c8] sm:$0xff]
    %v207 = vld [vmem:[#allocation10 + $0x1d0] sm:$0xff]
    %v208 = vld [vmem:[#allocation10 + $0x1d8] sm:$0xff]
    %v209 = vld [vmem:[#allocation10 + $0x1e0] sm:$0xff]
    %v210 = vld [vmem:[#allocation10 + $0x1e8] sm:$0xff]
    %v211 = vld [vmem:[#allocation10 + $0x1f0] sm:$0xff]
    %v212 = vld [vmem:[#allocation10 + $0x1f8] sm:$0xff]
    %v213 = vld [vmem:[#allocation11] sm:$0xff]
    %v214 = vld [vmem:[#allocation11 + $0x8] sm:$0xff]
    %v215 = vld [vmem:[#allocation11 + $0x10] sm:$0xff]
    %v216 = vld [vmem:[#allocation11 + $0x18] sm:$0xff]
    %v217 = vld [vmem:[#allocation11 + $0x20] sm:$0xff]
    %v218 = vld [vmem:[#allocation11 + $0x28] sm:$0xff]
    %v219 = vld [vmem:[#allocation11 + $0x30] sm:$0xff]
    %v220 = vld [vmem:[#allocation11 + $0x38] sm:$0xff]
    %v221 = vld [vmem:[#allocation11 + $0x40] sm:$0xff]
    %v222 = vld [vmem:[#allocation11 + $0x48] sm:$0xff]
    %v223 = vld [vmem:[#allocation11 + $0x50] sm:$0xff]
    %v224 = vld [vmem:[#allocation11 + $0x58] sm:$0xff]
    %v225 = vld [vmem:[#allocation11 + $0x60] sm:$0xff]
    %v226 = vld [vmem:[#allocation11 + $0x68] sm:$0xff]
    %v227 = vld [vmem:[#allocation11 + $0x70] sm:$0xff]
    %v228 = vld [vmem:[#allocation11 + $0x78] sm:$0xff]
    %v229 = vld [vmem:[#allocation11 + $0x80] sm:$0xff]
    %v230 = vld [vmem:[#allocation11 + $0x88] sm:$0xff]
    %v231 = vld [vmem:[#allocation11 + $0x90] sm:$0xff]
    %v232 = vld [vmem:[#allocation11 + $0x98] sm:$0xff]
    %v233 = vld [vmem:[#allocation11 + $0xa0] sm:$0xff]
    %v234 = vld [vmem:[#allocation11 + $0xa8] sm:$0xff]
    %v235 = vld [vmem:[#allocation11 + $0xb0] sm:$0xff]
    %v236 = vld [vmem:[#allocation11 + $0xb8] sm:$0xff]
    %v237 = vld [vmem:[#allocation11 + $0xc0] sm:$0xff]
    %v238 = vld [vmem:[#allocation11 + $0xc8] sm:$0xff]
    %v239 = vld [vmem:[#allocation11 + $0xd0] sm:$0xff]
    %v240 = vld [vmem:[#allocation11 + $0xd8] sm:$0xff]
    %v241 = vld [vmem:[#allocation11 + $0xe0] sm:$0xff]
    %v242 = vld [vmem:[#allocation11 + $0xe8] sm:$0xff]
    %v243 = vld [vmem:[#allocation11 + $0xf0] sm:$0xff]
    %v244 = vld [vmem:[#allocation11 + $0xf8] sm:$0xff]
    %v245 = vld [vmem:[#allocation11 + $0x100] sm:$0xff]
    %v246 = vld [vmem:[#allocation11 + $0x108] sm:$0xff]
    %v247 = vld [vmem:[#allocation11 + $0x110] sm:$0xff]
    %v248 = vld [vmem:[#allocation11 + $0x118] sm:$0xff]
    %v249 = vld [vmem:[#allocation11 + $0x120] sm:$0xff]
    %v250 = vld [vmem:[#allocation11 + $0x128] sm:$0xff]
    %v251 = vld [vmem:[#allocation11 + $0x130] sm:$0xff]
    %v252 = vld [vmem:[#allocation11 + $0x138] sm:$0xff]
    %v253 = vld [vmem:[#allocation11 + $0x140] sm:$0xff]
    %v254 = vld [vmem:[#allocation11 + $0x148] sm:$0xff]
    %v255 = vld [vmem:[#allocation11 + $0x150] sm:$0xff]
    %v256 = vld [vmem:[#allocation11 + $0x158] sm:$0xff]
    %v257 = vld [vmem:[#allocation11 + $0x160] sm:$0xff]
    %v258 = vld [vmem:[#allocation11 + $0x168] sm:$0xff]
    %v259 = vld [vmem:[#allocation11 + $0x170] sm:$0xff]
    %v260 = vld [vmem:[#allocation11 + $0x178] sm:$0xff]
    %v261 = vld [vmem:[#allocation11 + $0x180] sm:$0xff]
    %v262 = vld [vmem:[#allocation11 + $0x188] sm:$0xff]
    %v263 = vld [vmem:[#allocation11 + $0x190] sm:$0xff]
    %v264 = vld [vmem:[#allocation11 + $0x198] sm:$0xff]
    %v265 = vld [vmem:[#allocation11 + $0x1a0] sm:$0xff]
    %v266 = vld [vmem:[#allocation11 + $0x1a8] sm:$0xff]
    %v267 = vld [vmem:[#allocation11 + $0x1b0] sm:$0xff]
    %v268 = vld [vmem:[#allocation11 + $0x1b8] sm:$0xff]
    %v269 = vld [vmem:[#allocation11 + $0x1c0] sm:$0xff]
    %v270 = vld [vmem:[#allocation11 + $0x1c8] sm:$0xff]
    %v271 = vld [vmem:[#allocation11 + $0x1d0] sm:$0xff]
    %v272 = vld [vmem:[#allocation11 + $0x1d8] sm:$0xff]
    %v273 = vld [vmem:[#allocation11 + $0x1e0] sm:$0xff]
    %v274 = vld [vmem:[#allocation11 + $0x1e8] sm:$0xff]
    %v275 = vld [vmem:[#allocation11 + $0x1f0] sm:$0xff]
    %v276 = vld [vmem:[#allocation11 + $0x1f8] sm:$0xff]
    %v277 = vld [vmem:[#allocation13] sm:$0xff]
    %v278 = vld [vmem:[#allocation13 + $0x8] sm:$0xff]
    %v279 = vld [vmem:[#allocation13 + $0x10] sm:$0xff]
    %v280 = vld [vmem:[#allocation13 + $0x18] sm:$0xff]
    %v281 = vld [vmem:[#allocation13 + $0x20] sm:$0xff]
    %v282 = vld [vmem:[#allocation13 + $0x28] sm:$0xff]
    %v283 = vld [vmem:[#allocation13 + $0x30] sm:$0xff]
    %v284 = vld [vmem:[#allocation13 + $0x38] sm:$0xff]
    %v285 = vld [vmem:[#allocation13 + $0x40] sm:$0xff]
    %v286 = vld [vmem:[#allocation13 + $0x48] sm:$0xff]
    %v287 = vld [vmem:[#allocation13 + $0x50] sm:$0xff]
    %v288 = vld [vmem:[#allocation13 + $0x58] sm:$0xff]
    %v289 = vld [vmem:[#allocation13 + $0x60] sm:$0xff]
    %v290 = vld [vmem:[#allocation13 + $0x68] sm:$0xff]
    %v291 = vld [vmem:[#allocation13 + $0x70] sm:$0xff]
    %v292 = vld [vmem:[#allocation13 + $0x78] sm:$0xff]
    %v293 = vld [vmem:[#allocation13 + $0x80] sm:$0xff]
    %v294 = vld [vmem:[#allocation13 + $0x88] sm:$0xff]
    %v295 = vld [vmem:[#allocation13 + $0x90] sm:$0xff]
    %v296 = vld [vmem:[#allocation13 + $0x98] sm:$0xff]
    %v297 = vld [vmem:[#allocation13 + $0xa0] sm:$0xff]
    %v298 = vld [vmem:[#allocation13 + $0xa8] sm:$0xff]
    %v299 = vld [vmem:[#allocation13 + $0xb0] sm:$0xff]
    %v300 = vld [vmem:[#allocation13 + $0xb8] sm:$0xff]
    %v301 = vld [vmem:[#allocation13 + $0xc0] sm:$0xff]
    %v302 = vld [vmem:[#allocation13 + $0xc8] sm:$0xff]
    %v303 = vld [vmem:[#allocation13 + $0xd0] sm:$0xff]
    %v304 = vld [vmem:[#allocation13 + $0xd8] sm:$0xff]
    %v305 = vld [vmem:[#allocation13 + $0xe0] sm:$0xff]
    %v306 = vld [vmem:[#allocation13 + $0xe8] sm:$0xff]
    %v307 = vld [vmem:[#allocation13 + $0xf0] sm:$0xff]
    %v308 = vld [vmem:[#allocation13 + $0xf8] sm:$0xff]
    %v309 = vld [vmem:[#allocation13 + $0x100] sm:$0xff]
    %v310 = vld [vmem:[#allocation13 + $0x108] sm:$0xff]
    %v311 = vld [vmem:[#allocation13 + $0x110] sm:$0xff]
    %v312 = vld [vmem:[#allocation13 + $0x118] sm:$0xff]
    %v313 = vld [vmem:[#allocation13 + $0x120] sm:$0xff]
    %v314 = vld [vmem:[#allocation13 + $0x128] sm:$0xff]
    %v315 = vld [vmem:[#allocation13 + $0x130] sm:$0xff]
    %v316 = vld [vmem:[#allocation13 + $0x138] sm:$0xff]
    %v317 = vld [vmem:[#allocation13 + $0x140] sm:$0xff]
    %v318 = vld [vmem:[#allocation13 + $0x148] sm:$0xff]
    %v319 = vld [vmem:[#allocation13 + $0x150] sm:$0xff]
    %v320 = vld [vmem:[#allocation13 + $0x158] sm:$0xff]
    %v321 = vld [vmem:[#allocation13 + $0x160] sm:$0xff]
    %v322 = vld [vmem:[#allocation13 + $0x168] sm:$0xff]
    %v323 = vld [vmem:[#allocation13 + $0x170] sm:$0xff]
    %v324 = vld [vmem:[#allocation13 + $0x178] sm:$0xff]
    %v325 = vld [vmem:[#allocation13 + $0x180] sm:$0xff]
    %v326 = vld [vmem:[#allocation13 + $0x188] sm:$0xff]
    %v327 = vld [vmem:[#allocation13 + $0x190] sm:$0xff]
    %v328 = vld [vmem:[#allocation13 + $0x198] sm:$0xff]
    %v329 = vld [vmem:[#allocation13 + $0x1a0] sm:$0xff]
    %v330 = vld [vmem:[#allocation13 + $0x1a8] sm:$0xff]
    %v331 = vld [vmem:[#allocation13 + $0x1b0] sm:$0xff]
    %v332 = vld [vmem:[#allocation13 + $0x1b8] sm:$0xff]
    %v333 = vld [vmem:[#allocation13 + $0x1c0] sm:$0xff]
    %v334 = vld [vmem:[#allocation13 + $0x1c8] sm:$0xff]
    %v335 = vld [vmem:[#allocation13 + $0x1d0] sm:$0xff]
    %v336 = vld [vmem:[#allocation13 + $0x1d8] sm:$0xff]
    %v337 = vld [vmem:[#allocation13 + $0x1e0] sm:$0xff]
    %v338 = vld [vmem:[#allocation13 + $0x1e8] sm:$0xff]
    %v339 = vld [vmem:[#allocation13 + $0x1f0] sm:$0xff]
    %v340 = vld [vmem:[#allocation13 + $0x1f8] sm:$0xff]
    %v341 = vld [vmem:[#allocation14] sm:$0xff]
    %v342 = vld [vmem:[#allocation14 + $0x8] sm:$0xff]
    %v343 = vld [vmem:[#allocation14 + $0x10] sm:$0xff]
    %v344 = vld [vmem:[#allocation14 + $0x18] sm:$0xff]
    %v345 = vld [vmem:[#allocation14 + $0x20] sm:$0xff]
    %v346 = vld [vmem:[#allocation14 + $0x28] sm:$0xff]
    %v347 = vld [vmem:[#allocation14 + $0x30] sm:$0xff]
    %v348 = vld [vmem:[#allocation14 + $0x38] sm:$0xff]
    %v349 = vld [vmem:[#allocation14 + $0x40] sm:$0xff]
    %v350 = vld [vmem:[#allocation14 + $0x48] sm:$0xff]
    %v351 = vld [vmem:[#allocation14 + $0x50] sm:$0xff]
    %v352 = vld [vmem:[#allocation14 + $0x58] sm:$0xff]
    %v353 = vld [vmem:[#allocation14 + $0x60] sm:$0xff]
    %v354 = vld [vmem:[#allocation14 + $0x68] sm:$0xff]
    %v355 = vld [vmem:[#allocation14 + $0x70] sm:$0xff]
    %v356 = vld [vmem:[#allocation14 + $0x78] sm:$0xff]
    %v357 = vld [vmem:[#allocation14 + $0x80] sm:$0xff]
    %v358 = vld [vmem:[#allocation14 + $0x88] sm:$0xff]
    %v359 = vld [vmem:[#allocation14 + $0x90] sm:$0xff]
    %v360 = vld [vmem:[#allocation14 + $0x98] sm:$0xff]
    %v361 = vld [vmem:[#allocation14 + $0xa0] sm:$0xff]
    %v362 = vld [vmem:[#allocation14 + $0xa8] sm:$0xff]
    %v363 = vld [vmem:[#allocation14 + $0xb0] sm:$0xff]
    %v364 = vld [vmem:[#allocation14 + $0xb8] sm:$0xff]
    %v365 = vld [vmem:[#allocation14 + $0xc0] sm:$0xff]
    %v366 = vld [vmem:[#allocation14 + $0xc8] sm:$0xff]
    %v367 = vld [vmem:[#allocation14 + $0xd0] sm:$0xff]
    %v368 = vld [vmem:[#allocation14 + $0xd8] sm:$0xff]
    %v369 = vld [vmem:[#allocation14 + $0xe0] sm:$0xff]
    %v370 = vld [vmem:[#allocation14 + $0xe8] sm:$0xff]
    %v371 = vld [vmem:[#allocation14 + $0xf0] sm:$0xff]
    %v372 = vld [vmem:[#allocation14 + $0xf8] sm:$0xff]
    %v373 = vld [vmem:[%s8] ss:$4 sm:$0x3]
    %s374 = scalar_lea.vmem %s8, 1
    %v375 = vld [vmem:[%s374] ss:$4 sm:$0x3]
    %s376 = scalar_lea.vmem %s8, 2
    %v377 = vld [vmem:[%s376] ss:$4 sm:$0x3]
    %s378 = scalar_lea.vmem %s8, 3
    %v379 = vld [vmem:[%s378] ss:$4 sm:$0x3]
    %v380 = vld [vmem:[%s9] sm:$0x1]
    %v381 = vld [vmem:[#allocation2] sm:$0xff]
    %v382 = vld [vmem:[#allocation5] sm:$0xff]
    %vm383 = vcmask 130048
    %v385 = vsel %vm383, %v382, 0
    %387 = vmatprep.subr.mxu0 %v146
    %388 = vmatpush1.msra.mxu0 %v145
    %389 = vmatprep.subr.mxu0 %v148
    %390 = vmatpush1.msra.mxu0 %v147
    %391 = vmatprep.subr.mxu0 0.0
    %392 = vmatpush1.msra.mxu0 0.0
    %393 = vmatprep.subr.mxu0 0.0
    %394 = vmatpush1.msra.mxu0 0.0
    %395 = vmatprep.subr.mxu0 0.0
    %396 = vmatpush1.msra.mxu0 0.0
    %397 = vmatprep.subr.mxu0 0.0
    %398 = vmatpush1.msra.mxu0 0.0
    %399 = vmatprep.subr.mxu0 0.0
    %400 = vmatpush1.msra.mxu0 0.0
    %401 = vmatprep.subr.mxu0 0.0
    %402 = vmatpush1.msra.mxu0 0.0
    %403 = vmatprep.subr.mxu0 0.0
    %404 = vmatpush1.msra.mxu0 0.0
    %405 = vmatprep.subr.mxu0 0.0
    %406 = vmatpush1.msra.mxu0 0.0
    %407 = vmatprep.subr.mxu0 0.0
    %408 = vmatpush1.msra.mxu0 0.0
    %409 = vmatprep.subr.mxu0 0.0
    %410 = vmatpush1.msra.mxu0 0.0
    %411 = vmatprep.subr.mxu0 0.0
    %412 = vmatpush1.msra.mxu0 0.0
    %413 = vmatprep.subr.mxu0 0.0
    %414 = vmatpush1.msra.mxu0 0.0
    %415 = vmatprep.subr.mxu0 0.0
    %416 = vmatpush1.msra.mxu0 0.0
    %417 = vmatprep.subr.mxu0 0.0
    %418 = vmatpush1.msra.mxu0 0.0
    %419 = vmatprep.subr.mxu0 0.0
    %420 = vmatpush1.msra.mxu0 0.0
    %421 = vmatprep.subr.mxu0 0.0
    %422 = vmatpush1.msra.mxu0 0.0
    %423 = vmatprep.subr.mxu0 0.0
    %424 = vmatpush1.msra.mxu0 0.0
    %425 = vmatprep.subr.mxu0 0.0
    %426 = vmatpush1.msra.mxu0 0.0
    %427 = vmatprep.subr.mxu0 0.0
    %428 = vmatpush1.msra.mxu0 0.0
    %429 = vmatprep.subr.mxu0 0.0
    %430 = vmatpush1.msra.mxu0 0.0
    %431 = vmatprep.subr.mxu0 0.0
    %432 = vmatpush1.msra.mxu0 0.0
    %433 = vmatprep.subr.mxu0 0.0
    %434 = vmatpush1.msra.mxu0 0.0
    %435 = vmatprep.subr.mxu0 0.0
    %436 = vmatpush1.msra.mxu0 0.0
    %437 = vmatprep.subr.mxu0 0.0
    %438 = vmatpush1.msra.mxu0 0.0
    %439 = vmatprep.subr.mxu0 0.0
    %440 = vmatpush1.msra.mxu0 0.0
    %441 = vmatprep.subr.mxu0 0.0
    %442 = vmatpush1.msra.mxu0 0.0
    %443 = vmatprep.subr.mxu0 0.0
    %444 = vmatpush1.msra.mxu0 0.0
    %445 = vmatprep.subr.mxu0 0.0
    %446 = vmatpush1.msra.mxu0 0.0
    %447 = vmatprep.subr.mxu0 0.0
    %448 = vmatpush1.msra.mxu0 0.0
    %449 = vmatprep.subr.mxu0 0.0
    %450 = vmatpush1.msra.mxu0 0.0
    %451 = vmatprep.mubr.f32.mxu0 0.0
    %452 = vmatmul.mubr.f32.gmra.mrb[0].mxu0 %v385
    %v453 = vpop.f32.mrb[0].mxu0
    %v454 = vadd.f32 0.0, %v453
    %v455 = vpop.f32.mrb[0].mxu0
    %v456 = vadd.f32 0.0, %v455
    %457 = vdwg.mxu0
    %v459 = vsel %vm383, %v381, 0
    %461 = vmatprep.subr.mxu0 %v142
    %462 = vmatpush1.msra.mxu0 %v141
    %463 = vmatprep.subr.mxu0 %v144
    %464 = vmatpush1.msra.mxu0 %v143
    %465 = vmatprep.subr.mxu0 0.0
    %466 = vmatpush1.msra.mxu0 0.0
    %467 = vmatprep.subr.mxu0 0.0
    %468 = vmatpush1.msra.mxu0 0.0
    %469 = vmatprep.subr.mxu0 0.0
    %470 = vmatpush1.msra.mxu0 0.0
    %471 = vmatprep.subr.mxu0 0.0
    %472 = vmatpush1.msra.mxu0 0.0
    %473 = vmatprep.subr.mxu0 0.0
    %474 = vmatpush1.msra.mxu0 0.0
    %475 = vmatprep.subr.mxu0 0.0
    %476 = vmatpush1.msra.mxu0 0.0
    %477 = vmatprep.subr.mxu0 0.0
    %478 = vmatpush1.msra.mxu0 0.0
    %479 = vmatprep.subr.mxu0 0.0
    %480 = vmatpush1.msra.mxu0 0.0
    %481 = vmatprep.subr.mxu0 0.0
    %482 = vmatpush1.msra.mxu0 0.0
    %483 = vmatprep.subr.mxu0 0.0
    %484 = vmatpush1.msra.mxu0 0.0
    %485 = vmatprep.subr.mxu0 0.0
    %486 = vmatpush1.msra.mxu0 0.0
    %487 = vmatprep.subr.mxu0 0.0
    %488 = vmatpush1.msra.mxu0 0.0
    %489 = vmatprep.subr.mxu0 0.0
    %490 = vmatpush1.msra.mxu0 0.0
    %491 = vmatprep.subr.mxu0 0.0
    %492 = vmatpush1.msra.mxu0 0.0
    %493 = vmatprep.subr.mxu0 0.0
    %494 = vmatpush1.msra.mxu0 0.0
    %495 = vmatprep.subr.mxu0 0.0
    %496 = vmatpush1.msra.mxu0 0.0
    %497 = vmatprep.subr.mxu0 0.0
    %498 = vmatpush1.msra.mxu0 0.0
    %499 = vmatprep.subr.mxu0 0.0
    %500 = vmatpush1.msra.mxu0 0.0
    %501 = vmatprep.subr.mxu0 0.0
    %502 = vmatpush1.msra.mxu0 0.0
    %503 = vmatprep.subr.mxu0 0.0
    %504 = vmatpush1.msra.mxu0 0.0
    %505 = vmatprep.subr.mxu0 0.0
    %506 = vmatpush1.msra.mxu0 0.0
    %507 = vmatprep.subr.mxu0 0.0
    %508 = vmatpush1.msra.mxu0 0.0
    %509 = vmatprep.subr.mxu0 0.0
    %510 = vmatpush1.msra.mxu0 0.0
    %511 = vmatprep.subr.mxu0 0.0
    %512 = vmatpush1.msra.mxu0 0.0
    %513 = vmatprep.subr.mxu0 0.0
    %514 = vmatpush1.msra.mxu0 0.0
    %515 = vmatprep.subr.mxu0 0.0
    %516 = vmatpush1.msra.mxu0 0.0
    %517 = vmatprep.subr.mxu0 0.0
    %518 = vmatpush1.msra.mxu0 0.0
    %519 = vmatprep.subr.mxu0 0.0
    %520 = vmatpush1.msra.mxu0 0.0
    %521 = vmatprep.subr.mxu0 0.0
    %522 = vmatpush1.msra.mxu0 0.0
    %523 = vmatprep.subr.mxu0 0.0
    %524 = vmatpush1.msra.mxu0 0.0
    %525 = vmatprep.mubr.f32.mxu0 0.0
    %526 = vmatmul.mubr.f32.gmra.mrb[0].mxu0 %v459
    %v527 = vpop.f32.mrb[0].mxu0
    %v528 = vadd.f32 %v454, %v527
    %v529 = vpop.f32.mrb[0].mxu0
    %v530 = vadd.f32 %v456, %v529
    %531 = vdwg.mxu0
    %v533 = vlaneseq
    %v534 = vshrl.u32 %v533, 7
    %v535 = vsub.s32 0, %v534
    %v536 = vrot.slane %v373, %v535
    %v537 = vlaneseq
    %v538 = vshrl.u32 %v537, 7
    %v539 = vsub.s32 1, %v538
    %v540 = vrot.slane %v373, %v539
    %v543 = vadd.f32 %v528, %v536
    %v544 = vadd.f32 %v530, %v540
    %v545 = vmax.f32 %v543, 0.0
    %v546 = vmax.f32 %v544, 0.0
    %v548 = vlaneseq
    %v549 = vshrl.u32 %v548, 7
    %v550 = vsub.s32 0, %v549
    %v551 = vrot.slane %v375, %v550
    %v552 = vlaneseq
    %v553 = vshrl.u32 %v552, 7
    %v554 = vsub.s32 1, %v553
    %v555 = vrot.slane %v375, %v554
    %558 = vmatprep.subr.mxu0 %v150
    %559 = vmatpush1.msra.mxu0 %v149
    %560 = vmatprep.subr.mxu0 %v152
    %561 = vmatpush1.msra.mxu0 %v151
    %562 = vmatprep.subr.mxu0 %v154
    %563 = vmatpush1.msra.mxu0 %v153
    %564 = vmatprep.subr.mxu0 %v156
    %565 = vmatpush1.msra.mxu0 %v155
    %566 = vmatprep.subr.mxu0 %v158
    %567 = vmatpush1.msra.mxu0 %v157
    %568 = vmatprep.subr.mxu0 %v160
    %569 = vmatpush1.msra.mxu0 %v159
    %570 = vmatprep.subr.mxu0 %v162
    %571 = vmatpush1.msra.mxu0 %v161
    %572 = vmatprep.subr.mxu0 %v164
    %573 = vmatpush1.msra.mxu0 %v163
    %574 = vmatprep.subr.mxu0 %v166
    %575 = vmatpush1.msra.mxu0 %v165
    %576 = vmatprep.subr.mxu0 %v168
    %577 = vmatpush1.msra.mxu0 %v167
    %578 = vmatprep.subr.mxu0 %v170
    %579 = vmatpush1.msra.mxu0 %v169
    %580 = vmatprep.subr.mxu0 %v172
    %581 = vmatpush1.msra.mxu0 %v171
    %582 = vmatprep.subr.mxu0 %v174
    %583 = vmatpush1.msra.mxu0 %v173
    %584 = vmatprep.subr.mxu0 %v176
    %585 = vmatpush1.msra.mxu0 %v175
    %586 = vmatprep.subr.mxu0 %v178
    %587 = vmatpush1.msra.mxu0 %v177
    %588 = vmatprep.subr.mxu0 %v180
    %589 = vmatpush1.msra.mxu0 %v179
    %590 = vmatprep.subr.mxu0 %v182
    %591 = vmatpush1.msra.mxu0 %v181
    %592 = vmatprep.subr.mxu0 %v184
    %593 = vmatpush1.msra.mxu0 %v183
    %594 = vmatprep.subr.mxu0 %v186
    %595 = vmatpush1.msra.mxu0 %v185
    %596 = vmatprep.subr.mxu0 %v188
    %597 = vmatpush1.msra.mxu0 %v187
    %598 = vmatprep.subr.mxu0 %v190
    %599 = vmatpush1.msra.mxu0 %v189
    %600 = vmatprep.subr.mxu0 %v192
    %601 = vmatpush1.msra.mxu0 %v191
    %602 = vmatprep.subr.mxu0 %v194
    %603 = vmatpush1.msra.mxu0 %v193
    %604 = vmatprep.subr.mxu0 %v196
    %605 = vmatpush1.msra.mxu0 %v195
    %606 = vmatprep.subr.mxu0 %v198
    %607 = vmatpush1.msra.mxu0 %v197
    %608 = vmatprep.subr.mxu0 %v200
    %609 = vmatpush1.msra.mxu0 %v199
    %610 = vmatprep.subr.mxu0 %v202
    %611 = vmatpush1.msra.mxu0 %v201
    %612 = vmatprep.subr.mxu0 %v204
    %613 = vmatpush1.msra.mxu0 %v203
    %614 = vmatprep.subr.mxu0 %v206
    %615 = vmatpush1.msra.mxu0 %v205
    %616 = vmatprep.subr.mxu0 %v208
    %617 = vmatpush1.msra.mxu0 %v207
    %618 = vmatprep.subr.mxu0 %v210
    %619 = vmatpush1.msra.mxu0 %v209
    %620 = vmatprep.subr.mxu0 %v212
    %621 = vmatpush1.msra.mxu0 %v211
    %622 = vmatprep.mubr.f32.mxu0 %v546
    %623 = vmatmul.mubr.f32.gmra.mrb[0].mxu0 %v545
    %v624 = vpop.f32.mrb[0].mxu0
    %v625 = vadd.f32 %v551, %v624
    %v626 = vpop.f32.mrb[0].mxu0
    %v627 = vadd.f32 %v555, %v626
    %628 = vdwg.mxu0
    %v629 = vmax.f32 %v625, 0.0
    %v630 = vmax.f32 %v627, 0.0
    %v632 = vlaneseq
    %v633 = vshrl.u32 %v632, 7
    %v634 = vsub.s32 0, %v633
    %v635 = vrot.slane %v377, %v634
    %v636 = vlaneseq
    %v637 = vshrl.u32 %v636, 7
    %v638 = vsub.s32 1, %v637
    %v639 = vrot.slane %v377, %v638
    %642 = vmatprep.subr.mxu0 %v214
    %643 = vmatpush1.msra.mxu0 %v213
    %644 = vmatprep.subr.mxu0 %v216
    %645 = vmatpush1.msra.mxu0 %v215
    %646 = vmatprep.subr.mxu0 %v218
    %647 = vmatpush1.msra.mxu0 %v217
    %648 = vmatprep.subr.mxu0 %v220
    %649 = vmatpush1.msra.mxu0 %v219
    %650 = vmatprep.subr.mxu0 %v222
    %651 = vmatpush1.msra.mxu0 %v221
    %652 = vmatprep.subr.mxu0 %v224
    %653 = vmatpush1.msra.mxu0 %v223
    %654 = vmatprep.subr.mxu0 %v226
    %655 = vmatpush1.msra.mxu0 %v225
    %656 = vmatprep.subr.mxu0 %v228
    %657 = vmatpush1.msra.mxu0 %v227
    %658 = vmatprep.subr.mxu0 %v230
    %659 = vmatpush1.msra.mxu0 %v229
    %660 = vmatprep.subr.mxu0 %v232
    %661 = vmatpush1.msra.mxu0 %v231
    %662 = vmatprep.subr.mxu0 %v234
    %663 = vmatpush1.msra.mxu0 %v233
    %664 = vmatprep.subr.mxu0 %v236
    %665 = vmatpush1.msra.mxu0 %v235
    %666 = vmatprep.subr.mxu0 %v238
    %667 = vmatpush1.msra.mxu0 %v237
    %668 = vmatprep.subr.mxu0 %v240
    %669 = vmatpush1.msra.mxu0 %v239
    %670 = vmatprep.subr.mxu0 %v242
    %671 = vmatpush1.msra.mxu0 %v241
    %672 = vmatprep.subr.mxu0 %v244
    %673 = vmatpush1.msra.mxu0 %v243
    %674 = vmatprep.subr.mxu0 %v246
    %675 = vmatpush1.msra.mxu0 %v245
    %676 = vmatprep.subr.mxu0 %v248
    %677 = vmatpush1.msra.mxu0 %v247
    %678 = vmatprep.subr.mxu0 %v250
    %679 = vmatpush1.msra.mxu0 %v249
    %680 = vmatprep.subr.mxu0 %v252
    %681 = vmatpush1.msra.mxu0 %v251
    %682 = vmatprep.subr.mxu0 %v254
    %683 = vmatpush1.msra.mxu0 %v253
    %684 = vmatprep.subr.mxu0 %v256
    %685 = vmatpush1.msra.mxu0 %v255
    %686 = vmatprep.subr.mxu0 %v258
    %687 = vmatpush1.msra.mxu0 %v257
    %688 = vmatprep.subr.mxu0 %v260
    %689 = vmatpush1.msra.mxu0 %v259
    %690 = vmatprep.subr.mxu0 %v262
    %691 = vmatpush1.msra.mxu0 %v261
    %692 = vmatprep.subr.mxu0 %v264
    %693 = vmatpush1.msra.mxu0 %v263
    %694 = vmatprep.subr.mxu0 %v266
    %695 = vmatpush1.msra.mxu0 %v265
    %696 = vmatprep.subr.mxu0 %v268
    %697 = vmatpush1.msra.mxu0 %v267
    %698 = vmatprep.subr.mxu0 %v270
    %699 = vmatpush1.msra.mxu0 %v269
    %700 = vmatprep.subr.mxu0 %v272
    %701 = vmatpush1.msra.mxu0 %v271
    %702 = vmatprep.subr.mxu0 %v274
    %703 = vmatpush1.msra.mxu0 %v273
    %704 = vmatprep.subr.mxu0 %v276
    %705 = vmatpush1.msra.mxu0 %v275
    %706 = vmatprep.mubr.f32.mxu0 %v630
    %707 = vmatmul.mubr.f32.gmra.mrb[0].mxu0 %v629
    %v708 = vpop.f32.mrb[0].mxu0
    %v709 = vadd.f32 %v635, %v708
    %v710 = vpop.f32.mrb[0].mxu0
    %v711 = vadd.f32 %v639, %v710
    %712 = vdwg.mxu0
    %v713 = vmax.f32 %v709, 0.0
    %v714 = vmax.f32 %v711, 0.0
    %v716 = vlaneseq
    %v717 = vshrl.u32 %v716, 7
    %v718 = vsub.s32 0, %v717
    %v719 = vrot.slane %v379, %v718
    %v720 = vlaneseq
    %v721 = vshrl.u32 %v720, 7
    %v722 = vsub.s32 1, %v721
    %v723 = vrot.slane %v379, %v722
    %726 = vmatprep.subr.mxu0 %v278
    %727 = vmatpush1.msra.mxu0 %v277
    %728 = vmatprep.subr.mxu0 %v280
    %729 = vmatpush1.msra.mxu0 %v279
    %730 = vmatprep.subr.mxu0 %v282
    %731 = vmatpush1.msra.mxu0 %v281
    %732 = vmatprep.subr.mxu0 %v284
    %733 = vmatpush1.msra.mxu0 %v283
    %734 = vmatprep.subr.mxu0 %v286
    %735 = vmatpush1.msra.mxu0 %v285
    %736 = vmatprep.subr.mxu0 %v288
    %737 = vmatpush1.msra.mxu0 %v287
    %738 = vmatprep.subr.mxu0 %v290
    %739 = vmatpush1.msra.mxu0 %v289
    %740 = vmatprep.subr.mxu0 %v292
    %741 = vmatpush1.msra.mxu0 %v291
    %742 = vmatprep.subr.mxu0 %v294
    %743 = vmatpush1.msra.mxu0 %v293
    %744 = vmatprep.subr.mxu0 %v296
    %745 = vmatpush1.msra.mxu0 %v295
    %746 = vmatprep.subr.mxu0 %v298
    %747 = vmatpush1.msra.mxu0 %v297
    %748 = vmatprep.subr.mxu0 %v300
    %749 = vmatpush1.msra.mxu0 %v299
    %750 = vmatprep.subr.mxu0 %v302
    %751 = vmatpush1.msra.mxu0 %v301
    %752 = vmatprep.subr.mxu0 %v304
    %753 = vmatpush1.msra.mxu0 %v303
    %754 = vmatprep.subr.mxu0 %v306
    %755 = vmatpush1.msra.mxu0 %v305
    %756 = vmatprep.subr.mxu0 %v308
    %757 = vmatpush1.msra.mxu0 %v307
    %758 = vmatprep.subr.mxu0 %v310
    %759 = vmatpush1.msra.mxu0 %v309
    %760 = vmatprep.subr.mxu0 %v312
    %761 = vmatpush1.msra.mxu0 %v311
    %762 = vmatprep.subr.mxu0 %v314
    %763 = vmatpush1.msra.mxu0 %v313
    %764 = vmatprep.subr.mxu0 %v316
    %765 = vmatpush1.msra.mxu0 %v315
    %766 = vmatprep.subr.mxu0 %v318
    %767 = vmatpush1.msra.mxu0 %v317
    %768 = vmatprep.subr.mxu0 %v320
    %769 = vmatpush1.msra.mxu0 %v319
    %770 = vmatprep.subr.mxu0 %v322
    %771 = vmatpush1.msra.mxu0 %v321
    %772 = vmatprep.subr.mxu0 %v324
    %773 = vmatpush1.msra.mxu0 %v323
    %774 = vmatprep.subr.mxu0 %v326
    %775 = vmatpush1.msra.mxu0 %v325
    %776 = vmatprep.subr.mxu0 %v328
    %777 = vmatpush1.msra.mxu0 %v327
    %778 = vmatprep.subr.mxu0 %v330
    %779 = vmatpush1.msra.mxu0 %v329
    %780 = vmatprep.subr.mxu0 %v332
    %781 = vmatpush1.msra.mxu0 %v331
    %782 = vmatprep.subr.mxu0 %v334
    %783 = vmatpush1.msra.mxu0 %v333
    %784 = vmatprep.subr.mxu0 %v336
    %785 = vmatpush1.msra.mxu0 %v335
    %786 = vmatprep.subr.mxu0 %v338
    %787 = vmatpush1.msra.mxu0 %v337
    %788 = vmatprep.subr.mxu0 %v340
    %789 = vmatpush1.msra.mxu0 %v339
    %790 = vmatprep.mubr.f32.mxu0 %v714
    %791 = vmatmul.mubr.f32.gmra.mrb[0].mxu0 %v713
    %v792 = vpop.f32.mrb[0].mxu0
    %v793 = vadd.f32 %v719, %v792
    %v794 = vpop.f32.mrb[0].mxu0
    %v795 = vadd.f32 %v723, %v794
    %796 = vdwg.mxu0
    %v797 = vmax.f32 %v793, 0.0
    %v798 = vmax.f32 %v795, 0.0
    %v800 = vlaneseq
    %v801 = vshrl.u32 %v800, 7
    %v802 = vsub.s32 0, %v801
    %v803 = vrot.slane %v380, %v802
    %805 = vmatprep.subr.mxu0 0.0
    %806 = vmatpush1.msra.mxu0 %v341
    %807 = vmatprep.subr.mxu0 0.0
    %808 = vmatpush1.msra.mxu0 %v342
    %809 = vmatprep.subr.mxu0 0.0
    %810 = vmatpush1.msra.mxu0 %v343
    %811 = vmatprep.subr.mxu0 0.0
    %812 = vmatpush1.msra.mxu0 %v344
    %813 = vmatprep.subr.mxu0 0.0
    %814 = vmatpush1.msra.mxu0 %v345
    %815 = vmatprep.subr.mxu0 0.0
    %816 = vmatpush1.msra.mxu0 %v346
    %817 = vmatprep.subr.mxu0 0.0
    %818 = vmatpush1.msra.mxu0 %v347
    %819 = vmatprep.subr.mxu0 0.0
    %820 = vmatpush1.msra.mxu0 %v348
    %821 = vmatprep.subr.mxu0 0.0
    %822 = vmatpush1.msra.mxu0 %v349
    %823 = vmatprep.subr.mxu0 0.0
    %824 = vmatpush1.msra.mxu0 %v350
    %825 = vmatprep.subr.mxu0 0.0
    %826 = vmatpush1.msra.mxu0 %v351
    %827 = vmatprep.subr.mxu0 0.0
    %828 = vmatpush1.msra.mxu0 %v352
    %829 = vmatprep.subr.mxu0 0.0
    %830 = vmatpush1.msra.mxu0 %v353
    %831 = vmatprep.subr.mxu0 0.0
    %832 = vmatpush1.msra.mxu0 %v354
    %833 = vmatprep.subr.mxu0 0.0
    %834 = vmatpush1.msra.mxu0 %v355
    %835 = vmatprep.subr.mxu0 0.0
    %836 = vmatpush1.msra.mxu0 %v356
    %837 = vmatprep.subr.mxu0 0.0
    %838 = vmatpush1.msra.mxu0 %v357
    %839 = vmatprep.subr.mxu0 0.0
    %840 = vmatpush1.msra.mxu0 %v358
    %841 = vmatprep.subr.mxu0 0.0
    %842 = vmatpush1.msra.mxu0 %v359
    %843 = vmatprep.subr.mxu0 0.0
    %844 = vmatpush1.msra.mxu0 %v360
    %845 = vmatprep.subr.mxu0 0.0
    %846 = vmatpush1.msra.mxu0 %v361
    %847 = vmatprep.subr.mxu0 0.0
    %848 = vmatpush1.msra.mxu0 %v362
    %849 = vmatprep.subr.mxu0 0.0
    %850 = vmatpush1.msra.mxu0 %v363
    %851 = vmatprep.subr.mxu0 0.0
    %852 = vmatpush1.msra.mxu0 %v364
    %853 = vmatprep.subr.mxu0 0.0
    %854 = vmatpush1.msra.mxu0 %v365
    %855 = vmatprep.subr.mxu0 0.0
    %856 = vmatpush1.msra.mxu0 %v366
    %857 = vmatprep.subr.mxu0 0.0
    %858 = vmatpush1.msra.mxu0 %v367
    %859 = vmatprep.subr.mxu0 0.0
    %860 = vmatpush1.msra.mxu0 %v368
    %861 = vmatprep.subr.mxu0 0.0
    %862 = vmatpush1.msra.mxu0 %v369
    %863 = vmatprep.subr.mxu0 0.0
    %864 = vmatpush1.msra.mxu0 %v370
    %865 = vmatprep.subr.mxu0 0.0
    %866 = vmatpush1.msra.mxu0 %v371
    %867 = vmatprep.subr.mxu0 0.0
    %868 = vmatpush1.msra.mxu0 %v372
    %869 = vmatprep.mubr.f32.mxu0 %v798
    %870 = vmatmul.mubr.f32.gmra.mrb[0].mxu0 %v797
    %v871 = vpop.f32.mrb[0].mxu0
    %v872 = vadd.f32 %v803, %v871
    %v873 = vpop.f32.mrb[0].mxu0
    %874 = vdwg.mxu0
    %v875 = vtanh.pop %v872
    %v876 = vmul.f32 %v875, 2.0
    %877 = vst [vmem:[#allocation16] sm:$0xff] %v876
    // Predicated region
    $region74: #{tpu_custom_call.1} parent=1 // pred_check
      _
    $region75: #{tpu_custom_call.1} parent=1 // pred_check_branch
      %879 = sbr.rel (0) target = $region77
    $region76: #{tpu_custom_call.1} parent=1 // pred_region
      %s881 = ssub.s32 128, 128
      %882 = vsyncadd [#allocation4], %s881
      %s884 = sshll.u32 [#allocation16], 4
      %s885 = int_to_ptr.vmem [resolvable:$true] %s884
      %887 = dma.vmem_to_hbm [thread:$0]  %s885, 128, %s10, [#allocation4]
    $region77: #{tpu_custom_call.1} parent=1 // pred_fallthru
      _
    // Predicated region
    $region78: #{tpu_custom_call.1} parent=1 // pred_check
      _
    $region79: #{tpu_custom_call.1} parent=1 // pred_check_branch
      %889 = sbr.rel (0) target = $region81
    $region80: #{tpu_custom_call.1} parent=1 // pred_region
      %890 = dma.done [#allocation4], 128
    $region81: #{tpu_custom_call.1} parent=1 // pred_fallthru
      _
    %891 = vsyncpa [#allocation3], 1
    %892 = vsyncpa [#allocation6], 1
    %893 = vsyncpa [#allocation9], 1
    %894 = vsyncpa [#allocation12], 1
    %895 = vsyncpa [#allocation15], 1
    %896 = vsyncpa [#allocation4], 1

</llo_original>
